<compile_context>
chip_gen: v7x
topology: tpu7x:2x2x1
jax: 0.10.0
libtpu: 0.0.40
codegen_flags: <defaults>
</compile_context>

<pallas_src>
import jax
import jax.numpy as jnp
from jax.experimental import pallas as pl
from jax.experimental.pallas import tpu as pltpu

SUBLANE = 8     # f32 sublane granularity: minimum batch-tile rows
MAX_TB = 512    # largest batch tile (amortizes ~0.35 us per grid step)


def fnn_kernel(x_ref, w1_ref, b1_ref, w2_ref, b2_ref, w3_ref, b3_ref, o_ref):
    # Three dense matmuls + two ReLUs, fully resident in VMEM.  Bias adds are
    # broadcast VPU ops that co-issue in spare VALU slots, so they are
    # effectively free and keep the kernel robust to future activation /
    # dropout changes (no homogeneous-1 fragility).
    x = x_ref[...]                                                    # (TB, K)
    h1 = jnp.maximum(
        jnp.dot(x, w1_ref[...], preferred_element_type=jnp.float32)
        + b1_ref[...], 0.0)                                           # (TB, H1)
    h2 = jnp.maximum(
        jnp.dot(h1, w2_ref[...], preferred_element_type=jnp.float32)
        + b2_ref[...], 0.0)                                           # (TB, H2)
    out = (jnp.dot(h2, w3_ref[...], preferred_element_type=jnp.float32)
           + b3_ref[...])                                             # (TB, O)
    o_ref[...] = out.astype(o_ref.dtype)


def _round_up(n, m):
    return ((n + m - 1) // m) * m


def _batch_tiling(batch):
    """Pick (B_pad, TB): pad batch to a multiple of 8, grow the tile with the
    batch (up to 512), and guarantee >=2 grid steps for large batches so the
    parallel grid axis can shard across dual-TC chips (v7x)."""
    b8 = _round_up(max(batch, 1), SUBLANE)
    tb = min(b8, MAX_TB)
    if b8 >= 256:                         # large enough to split usefully
        tb = min(tb, _round_up(b8 // 2, SUBLANE))
    tb = _round_up(tb, SUBLANE)
    b_pad = _round_up(b8, tb)
    return b_pad, tb


def fnn_forward(x, w1, b1, w2, b2, w3, b3):
    B, K = x.shape
    H1 = w1.shape[1]
    H2 = w2.shape[1]
    O = w3.shape[1]

    B_pad, TB = _batch_tiling(B)

    x = x.astype(jnp.float32)
    if B_pad != B:
        # Only touch x when the batch is not already sublane-aligned.
        x = jnp.pad(x, ((0, B_pad - B), (0, 0)))

    # Natural-shape params (full-extent blocks are legal BlockSpecs); no
    # per-call packing/padding scatters left in the hot path.
    w1 = w1.astype(jnp.float32)
    w2 = w2.astype(jnp.float32)
    w3 = w3.astype(jnp.float32)
    b1r = b1.reshape(1, H1).astype(jnp.float32)
    b2r = b2.reshape(1, H2).astype(jnp.float32)
    b3r = b3.reshape(1, O).astype(jnp.float32)

    grid = (B_pad // TB,)

    out = pl.pallas_call(
        fnn_kernel,
        out_shape=jax.ShapeDtypeStruct((B_pad, O), jnp.float32),
        grid=grid,
        in_specs=[
            # Activation tile walks the batch; weights/biases stay resident.
            pl.BlockSpec((TB, K), lambda i: (i, 0)),
            pl.BlockSpec((K, H1), lambda i: (0, 0)),
            pl.BlockSpec((1, H1), lambda i: (0, 0)),
            pl.BlockSpec((H1, H2), lambda i: (0, 0)),
            pl.BlockSpec((1, H2), lambda i: (0, 0)),
            pl.BlockSpec((H2, O), lambda i: (0, 0)),
            pl.BlockSpec((1, O), lambda i: (0, 0)),
        ],
        out_specs=pl.BlockSpec((TB, O), lambda i: (i, 0)),
        compiler_params=pltpu.CompilerParams(
            dimension_semantics=("parallel",)),
    )(x, w1, b1r, w2, b2r, w3, b3r)

    # Narrow only when batch padding was actually applied.
    return out if B_pad == B else out[:B]


def init_linear(key, fan_in, fan_out):
    # Mimics nn.Linear's default U(-1/sqrt(fan_in), +1/sqrt(fan_in)).
    kw, kb = jax.random.split(key)
    bound = 1.0 / jnp.sqrt(fan_in)
    w = jax.random.uniform(kw, (fan_in, fan_out), jnp.float32, -bound, bound)
    b = jax.random.uniform(kb, (fan_out,), jnp.float32, -bound, bound)
    return w, b


if __name__ == "__main__":
    # Small shapes consistent with the module's forward pass.
    batch, input_dim, hidden_dim_1, hidden_dim_2, output_dim = 8, 64, 32, 32, 1

    key = jax.random.PRNGKey(0)
    kx, k1, k2, k3 = jax.random.split(key, 4)

    x = jax.random.normal(kx, (batch, input_dim), jnp.float32)
    w1, b1 = init_linear(k1, input_dim, hidden_dim_1)
    w2, b2 = init_linear(k2, hidden_dim_1, hidden_dim_2)
    w3, b3 = init_linear(k3, hidden_dim_2, output_dim)

    out = fnn_forward(x, w1, b1, w2, b2, w3, b3)
    jax.block_until_ready(out)

    # Reference check in plain JAX (same math as the PyTorch forward).
    ref = jnp.maximum(x @ w1 + b1, 0.0)
    ref = jnp.maximum(ref @ w2 + b2, 0.0)
    ref = ref @ w3 + b3
    assert out.shape == (batch, output_dim)
    assert jnp.allclose(out, ref, atol=1e-3, rtol=1e-3), (
        float(jnp.max(jnp.abs(out - ref))))

    print("KERNEL_OK")
</pallas_src>

<mosaic_0001>
module attributes {stable_mosaic.version = 11 : i64} {
  func.func @fnn_kernel(%arg0: i32, %arg1: memref<8x64xf32, #tpu.memory_space<vmem>>, %arg2: memref<64x32xf32, #tpu.memory_space<vmem>>, %arg3: memref<1x32xf32, #tpu.memory_space<vmem>>, %arg4: memref<32x32xf32, #tpu.memory_space<vmem>>, %arg5: memref<1x32xf32, #tpu.memory_space<vmem>>, %arg6: memref<32x1xf32, #tpu.memory_space<vmem>>, %arg7: memref<1x1xf32, #tpu.memory_space<vmem>>, %arg8: memref<8x1xf32, #tpu.memory_space<vmem>>) attributes {dimension_semantics = [#tpu.dimension_semantics<parallel>], iteration_bounds = array<i64: 1>, scalar_prefetch = 0 : i64, scratch_operands = 0 : i64, tpu.core_type = #tpu.core_type<tc>, window_params = [{transform_indices = @transform_0, window_bounds = array<i64: 8, 64>}, {pipeline_mode = #tpu.pipeline_mode<synchronous>, transform_indices = @transform_1, window_bounds = array<i64: 64, 32>}, {pipeline_mode = #tpu.pipeline_mode<synchronous>, transform_indices = @transform_2, window_bounds = array<i64: 1, 32>}, {pipeline_mode = #tpu.pipeline_mode<synchronous>, transform_indices = @transform_3, window_bounds = array<i64: 32, 32>}, {pipeline_mode = #tpu.pipeline_mode<synchronous>, transform_indices = @transform_4, window_bounds = array<i64: 1, 32>}, {pipeline_mode = #tpu.pipeline_mode<synchronous>, transform_indices = @transform_5, window_bounds = array<i64: 32, 1>}, {pipeline_mode = #tpu.pipeline_mode<synchronous>, transform_indices = @transform_6, window_bounds = array<i64: 1, 1>}, {transform_indices = @transform_7, window_bounds = array<i64: 8, 1>}]} {
    %c0 = arith.constant 0 : index
    %c0_0 = arith.constant 0 : index
    %0 = vector.load %arg1[%c0, %c0_0] : memref<8x64xf32, #tpu.memory_space<vmem>>, vector<8x64xf32>
    %c0_1 = arith.constant 0 : index
    %c0_2 = arith.constant 0 : index
    %1 = vector.load %arg2[%c0_1, %c0_2] : memref<64x32xf32, #tpu.memory_space<vmem>>, vector<64x32xf32>
    %cst = arith.constant dense<0.000000e+00> : vector<8x32xf32>
    %2 = tpu.matmul %0, %1, %cst {dimension_numbers = #tpu.dot_dimension_numbers<[1], [0], [0], [1], [0, 0, 1, 1], [], []>} : vector<8x64xf32>, vector<64x32xf32>, vector<8x32xf32> -> vector<8x32xf32>
    %c0_3 = arith.constant 0 : index
    %c0_4 = arith.constant 0 : index
    %3 = vector.load %arg3[%c0_3, %c0_4] : memref<1x32xf32, #tpu.memory_space<vmem>>, vector<1x32xf32>
    %4 = vector.broadcast %3 : vector<1x32xf32> to vector<8x32xf32>
    %5 = arith.addf %2, %4 : vector<8x32xf32>
    %cst_5 = arith.constant 0.000000e+00 : f32
    %6 = vector.broadcast %cst_5 : f32 to vector<8x32xf32>
    %7 = arith.maximumf %5, %6 : vector<8x32xf32>
    %c0_6 = arith.constant 0 : index
    %c0_7 = arith.constant 0 : index
    %8 = vector.load %arg4[%c0_6, %c0_7] : memref<32x32xf32, #tpu.memory_space<vmem>>, vector<32x32xf32>
    %cst_8 = arith.constant dense<0.000000e+00> : vector<8x32xf32>
    %9 = tpu.matmul %7, %8, %cst_8 {dimension_numbers = #tpu.dot_dimension_numbers<[1], [0], [0], [1], [0, 0, 1, 1], [], []>} : vector<8x32xf32>, vector<32x32xf32>, vector<8x32xf32> -> vector<8x32xf32>
    %c0_9 = arith.constant 0 : index
    %c0_10 = arith.constant 0 : index
    %10 = vector.load %arg5[%c0_9, %c0_10] : memref<1x32xf32, #tpu.memory_space<vmem>>, vector<1x32xf32>
    %11 = vector.broadcast %10 : vector<1x32xf32> to vector<8x32xf32>
    %12 = arith.addf %9, %11 : vector<8x32xf32>
    %cst_11 = arith.constant 0.000000e+00 : f32
    %13 = vector.broadcast %cst_11 : f32 to vector<8x32xf32>
    %14 = arith.maximumf %12, %13 : vector<8x32xf32>
    %c0_12 = arith.constant 0 : index
    %c0_13 = arith.constant 0 : index
    %15 = vector.load %arg6[%c0_12, %c0_13] : memref<32x1xf32, #tpu.memory_space<vmem>>, vector<32x1xf32>
    %cst_14 = arith.constant dense<0.000000e+00> : vector<8x1xf32>
    %16 = tpu.matmul %14, %15, %cst_14 {dimension_numbers = #tpu.dot_dimension_numbers<[1], [0], [0], [1], [0, 0, 1, 1], [], []>} : vector<8x32xf32>, vector<32x1xf32>, vector<8x1xf32> -> vector<8x1xf32>
    %c0_15 = arith.constant 0 : index
    %c0_16 = arith.constant 0 : index
    %17 = vector.load %arg7[%c0_15, %c0_16] : memref<1x1xf32, #tpu.memory_space<vmem>>, vector<1x1xf32>
    %18 = vector.broadcast %17 : vector<1x1xf32> to vector<8x1xf32>
    %19 = arith.addf %16, %18 : vector<8x1xf32>
    %c0_17 = arith.constant 0 : index
    %c0_18 = arith.constant 0 : index
    %20 = vector.load %arg8[%c0_17, %c0_18] : memref<8x1xf32, #tpu.memory_space<vmem>>, vector<8x1xf32>
    tpu.vector_store %arg8[%c0_17, %c0_18], %19 {strides = array<i32>} : memref<8x1xf32, #tpu.memory_space<vmem>>, vector<8x1xf32>,
    return
  }
  func.func @transform_0(%arg0: i32) -> (i32, i32) {
    %c0_i32 = arith.constant 0 : i32
    %c0_i32_0 = arith.constant 0 : i32
    return %arg0, %c0_i32 : i32, i32
  }
  func.func @transform_1(%arg0: i32) -> (i32, i32) {
    %c0_i32 = arith.constant 0 : i32
    %c0_i32_0 = arith.constant 0 : i32
    %c0_i32_1 = arith.constant 0 : i32
    return %c0_i32, %c0_i32_0 : i32, i32
  }
  func.func @transform_2(%arg0: i32) -> (i32, i32) {
    %c0_i32 = arith.constant 0 : i32
    %c0_i32_0 = arith.constant 0 : i32
    %c0_i32_1 = arith.constant 0 : i32
    return %c0_i32, %c0_i32_0 : i32, i32
  }
  func.func @transform_3(%arg0: i32) -> (i32, i32) {
    %c0_i32 = arith.constant 0 : i32
    %c0_i32_0 = arith.constant 0 : i32
    %c0_i32_1 = arith.constant 0 : i32
    return %c0_i32, %c0_i32_0 : i32, i32
  }
  func.func @transform_4(%arg0: i32) -> (i32, i32) {
    %c0_i32 = arith.constant 0 : i32
    %c0_i32_0 = arith.constant 0 : i32
    %c0_i32_1 = arith.constant 0 : i32
    return %c0_i32, %c0_i32_0 : i32, i32
  }
  func.func @transform_5(%arg0: i32) -> (i32, i32) {
    %c0_i32 = arith.constant 0 : i32
    %c0_i32_0 = arith.constant 0 : i32
    %c0_i32_1 = arith.constant 0 : i32
    return %c0_i32, %c0_i32_0 : i32, i32
  }
  func.func @transform_6(%arg0: i32) -> (i32, i32) {
    %c0_i32 = arith.constant 0 : i32
    %c0_i32_0 = arith.constant 0 : i32
    %c0_i32_1 = arith.constant 0 : i32
    return %c0_i32, %c0_i32_0 : i32, i32
  }
  func.func @transform_7(%arg0: i32) -> (i32, i32) {
    %c0_i32 = arith.constant 0 : i32
    %c0_i32_0 = arith.constant 0 : i32
    return %arg0, %c0_i32 : i32, i32
  }
}

</mosaic_0001>

<llo_original>
// kernel: tpu_custom_call.1
$region0: #{tpu_custom_call.1}
  #allocation0 [shape = 'u32[]', space=smem, size = 0x4, offset = 0x4, fixed_abs, tag = 'smem constant byte address 0x4 - core index']
  #allocation1 [shape = 'u32[144,128]{1,0:T(1,128)}', space=vmem, size = 0x12000, scoped, tag = 'internal scratch']
  #allocation2 [shape = 'f32[1,1]{1,0:T(1,128)S(1)}', space=vmem, size = 0x200, scoped, tag = 'scoped memory for tpu_custom_call.1']
  %s0 = inlined_call_operand.vmem [shape: f32[8,64], index: 0, kind: input, shape index: {}]
  %s1 = inlined_call_operand.vmem [shape: f32[64,32], index: 1, kind: input, shape index: {}]
  %s2 = inlined_call_operand.vmem [shape: f32[1,32], index: 2, kind: input, shape index: {}]
  %s3 = inlined_call_operand.vmem [shape: f32[32,32], index: 3, kind: input, shape index: {}]
  %s4 = inlined_call_operand.vmem [shape: f32[1,32], index: 4, kind: input, shape index: {}]
  %s5 = inlined_call_operand.vmem [shape: f32[32,1], index: 5, kind: input, shape index: {}]
  %s6 = inlined_call_operand.<no memory space> [shape: f32[1,1], index: 6, kind: input, shape index: {}]
  %s7 = inlined_call_operand.vmem [shape: f32[8,1], index: 7, kind: output, shape index: {}]
  %s8 = sld [smem:[#allocation0]]
  $region38: #{tpu_custom_call.1} parent=0
    _
  %s10 = ssub.s32 1, %s8
  %s11 = scalar_select 0, %s10, %s8
  %v12 = vstv %s6
  %13 = vst [vmem:[#allocation2] sm:$0x1] %v12
  // Predicated region
  $region2: #{tpu_custom_call.1} parent=0 // pred_check
    _
  $region3: #{tpu_custom_call.1} parent=0 // pred_check_branch
    %15 = sbr.rel (0) target = $region5
  $region4: #{tpu_custom_call.1} parent=0 // pred_region
    _
  $region5: #{tpu_custom_call.1} parent=0 // pred_fallthru
    _
  // Predicated region
  $region6: #{tpu_custom_call.1} parent=0 // pred_check
    _
  $region7: #{tpu_custom_call.1} parent=0 // pred_check_branch
    %17 = sbr.rel (0) target = $region9
  $region8: #{tpu_custom_call.1} parent=0 // pred_region
    _
  $region9: #{tpu_custom_call.1} parent=0 // pred_fallthru
    _
  // Predicated region
  $region10: #{tpu_custom_call.1} parent=0 // pred_check
    _
  $region11: #{tpu_custom_call.1} parent=0 // pred_check_branch
    %19 = sbr.rel (0) target = $region13
  $region12: #{tpu_custom_call.1} parent=0 // pred_region
    _
  $region13: #{tpu_custom_call.1} parent=0 // pred_fallthru
    _
  // Predicated region
  $region14: #{tpu_custom_call.1} parent=0 // pred_check
    _
  $region15: #{tpu_custom_call.1} parent=0 // pred_check_branch
    %21 = sbr.rel (0) target = $region17
  $region16: #{tpu_custom_call.1} parent=0 // pred_region
    _
  $region17: #{tpu_custom_call.1} parent=0 // pred_fallthru
    _
  // Predicated region
  $region18: #{tpu_custom_call.1} parent=0 // pred_check
    _
  $region19: #{tpu_custom_call.1} parent=0 // pred_check_branch
    %23 = sbr.rel (0) target = $region21
  $region20: #{tpu_custom_call.1} parent=0 // pred_region
    _
  $region21: #{tpu_custom_call.1} parent=0 // pred_fallthru
    _
  // Predicated region
  $region22: #{tpu_custom_call.1} parent=0 // pred_check
    _
  $region23: #{tpu_custom_call.1} parent=0 // pred_check_branch
    %25 = sbr.rel (0) target = $region25
  $region24: #{tpu_custom_call.1} parent=0 // pred_region
    _
  $region25: #{tpu_custom_call.1} parent=0 // pred_fallthru
    _
  // Predicated region
  $region26: #{tpu_custom_call.1} parent=0 // pred_check
    _
  $region27: #{tpu_custom_call.1} parent=0 // pred_check_branch
    %27 = sbr.rel (0) target = $region29
  $region28: #{tpu_custom_call.1} parent=0 // pred_region
    _
  $region29: #{tpu_custom_call.1} parent=0 // pred_fallthru
    _
  %v28 = vld [vmem:[%s0] sm:$0xff]
  %v29 = vld [vmem:[%s1] sm:$0xff]
  %v30 = vld [vmem:[%s1 + $0x8] sm:$0xff]
  %v31 = vld [vmem:[%s1 + $0x10] sm:$0xff]
  %v32 = vld [vmem:[%s1 + $0x18] sm:$0xff]
  %v33 = vld [vmem:[%s1 + $0x20] sm:$0xff]
  %v34 = vld [vmem:[%s1 + $0x28] sm:$0xff]
  %v35 = vld [vmem:[%s1 + $0x30] sm:$0xff]
  %v36 = vld [vmem:[%s1 + $0x38] sm:$0xff]
  %v37 = vld [vmem:[%s2] sm:$0x1]
  %v39 = vlaneseq
  %v40 = vshrl.u32 %v39, 7
  %v41 = vsub.s32 0, %v40
  %v42 = vrot.slane %v37, %v41
  %vm44 = vcmask 523264
  %v46 = vsel %vm44, %v28, 0
  %48 = vmatprep.subr.mxu0 0.0
  %49 = vmatpush1.msra.mxu0 %v29
  %50 = vmatprep.subr.mxu0 0.0
  %51 = vmatpush1.msra.mxu0 %v30
  %52 = vmatprep.subr.mxu0 0.0
  %53 = vmatpush1.msra.mxu0 %v31
  %54 = vmatprep.subr.mxu0 0.0
  %55 = vmatpush1.msra.mxu0 %v32
  %56 = vmatprep.subr.mxu0 0.0
  %57 = vmatpush1.msra.mxu0 %v33
  %58 = vmatprep.subr.mxu0 0.0
  %59 = vmatpush1.msra.mxu0 %v34
  %60 = vmatprep.subr.mxu0 0.0
  %61 = vmatpush1.msra.mxu0 %v35
  %62 = vmatprep.subr.mxu0 0.0
  %63 = vmatpush1.msra.mxu0 %v36
  %64 = vmatprep.subr.mxu0 0.0
  %65 = vmatpush1.msra.mxu0 0.0
  %66 = vmatprep.subr.mxu0 0.0
  %67 = vmatpush1.msra.mxu0 0.0
  %68 = vmatprep.subr.mxu0 0.0
  %69 = vmatpush1.msra.mxu0 0.0
  %70 = vmatprep.subr.mxu0 0.0
  %71 = vmatpush1.msra.mxu0 0.0
  %72 = vmatprep.subr.mxu0 0.0
  %73 = vmatpush1.msra.mxu0 0.0
  %74 = vmatprep.subr.mxu0 0.0
  %75 = vmatpush1.msra.mxu0 0.0
  %76 = vmatprep.subr.mxu0 0.0
  %77 = vmatpush1.msra.mxu0 0.0
  %78 = vmatprep.subr.mxu0 0.0
  %79 = vmatpush1.msra.mxu0 0.0
  %80 = vmatprep.subr.mxu0 0.0
  %81 = vmatpush1.msra.mxu0 0.0
  %82 = vmatprep.subr.mxu0 0.0
  %83 = vmatpush1.msra.mxu0 0.0
  %84 = vmatprep.subr.mxu0 0.0
  %85 = vmatpush1.msra.mxu0 0.0
  %86 = vmatprep.subr.mxu0 0.0
  %87 = vmatpush1.msra.mxu0 0.0
  %88 = vmatprep.subr.mxu0 0.0
  %89 = vmatpush1.msra.mxu0 0.0
  %90 = vmatprep.subr.mxu0 0.0
  %91 = vmatpush1.msra.mxu0 0.0
  %92 = vmatprep.subr.mxu0 0.0
  %93 = vmatpush1.msra.mxu0 0.0
  %94 = vmatprep.subr.mxu0 0.0
  %95 = vmatpush1.msra.mxu0 0.0
  %96 = vmatprep.subr.mxu0 0.0
  %97 = vmatpush1.msra.mxu0 0.0
  %98 = vmatprep.subr.mxu0 0.0
  %99 = vmatpush1.msra.mxu0 0.0
  %100 = vmatprep.subr.mxu0 0.0
  %101 = vmatpush1.msra.mxu0 0.0
  %102 = vmatprep.subr.mxu0 0.0
  %103 = vmatpush1.msra.mxu0 0.0
  %104 = vmatprep.subr.mxu0 0.0
  %105 = vmatpush1.msra.mxu0 0.0
  %106 = vmatprep.subr.mxu0 0.0
  %107 = vmatpush1.msra.mxu0 0.0
  %108 = vmatprep.subr.mxu0 0.0
  %109 = vmatpush1.msra.mxu0 0.0
  %110 = vmatprep.subr.mxu0 0.0
  %111 = vmatpush1.msra.mxu0 0.0
  %112 = vmatprep.mubr.f32.mxu0 0.0
  %113 = vmatmul.mubr.f32.gmra.mrb[0].mxu0 %v46
  %v114 = vpop.f32.mrb[0].mxu0
  %v115 = vadd.f32 %v42, %v114
  %v116 = vpop.f32.mrb[0].mxu0
  %117 = vdwg.mxu0
  %v118 = vmax.f32 %v115, 0.0
  %v119 = vld [vmem:[%s3] sm:$0xff]
  %v120 = vld [vmem:[%s3 + $0x8] sm:$0xff]
  %v121 = vld [vmem:[%s3 + $0x10] sm:$0xff]
  %v122 = vld [vmem:[%s3 + $0x18] sm:$0xff]
  %v123 = vld [vmem:[%s4] sm:$0x1]
  %v125 = vlaneseq
  %v126 = vshrl.u32 %v125, 7
  %v127 = vsub.s32 0, %v126
  %v128 = vrot.slane %v123, %v127
  %vm130 = vcmask 261120
  %v132 = vsel %vm130, %v118, 0
  %134 = vmatprep.subr.mxu0 0.0
  %135 = vmatpush1.msra.mxu0 %v119
  %136 = vmatprep.subr.mxu0 0.0
  %137 = vmatpush1.msra.mxu0 %v120
  %138 = vmatprep.subr.mxu0 0.0
  %139 = vmatpush1.msra.mxu0 %v121
  %140 = vmatprep.subr.mxu0 0.0
  %141 = vmatpush1.msra.mxu0 %v122
  %142 = vmatprep.subr.mxu0 0.0
  %143 = vmatpush1.msra.mxu0 0.0
  %144 = vmatprep.subr.mxu0 0.0
  %145 = vmatpush1.msra.mxu0 0.0
  %146 = vmatprep.subr.mxu0 0.0
  %147 = vmatpush1.msra.mxu0 0.0
  %148 = vmatprep.subr.mxu0 0.0
  %149 = vmatpush1.msra.mxu0 0.0
  %150 = vmatprep.subr.mxu0 0.0
  %151 = vmatpush1.msra.mxu0 0.0
  %152 = vmatprep.subr.mxu0 0.0
  %153 = vmatpush1.msra.mxu0 0.0
  %154 = vmatprep.subr.mxu0 0.0
  %155 = vmatpush1.msra.mxu0 0.0
  %156 = vmatprep.subr.mxu0 0.0
  %157 = vmatpush1.msra.mxu0 0.0
  %158 = vmatprep.subr.mxu0 0.0
  %159 = vmatpush1.msra.mxu0 0.0
  %160 = vmatprep.subr.mxu0 0.0
  %161 = vmatpush1.msra.mxu0 0.0
  %162 = vmatprep.subr.mxu0 0.0
  %163 = vmatpush1.msra.mxu0 0.0
  %164 = vmatprep.subr.mxu0 0.0
  %165 = vmatpush1.msra.mxu0 0.0
  %166 = vmatprep.subr.mxu0 0.0
  %167 = vmatpush1.msra.mxu0 0.0
  %168 = vmatprep.subr.mxu0 0.0
  %169 = vmatpush1.msra.mxu0 0.0
  %170 = vmatprep.subr.mxu0 0.0
  %171 = vmatpush1.msra.mxu0 0.0
  %172 = vmatprep.subr.mxu0 0.0
  %173 = vmatpush1.msra.mxu0 0.0
  %174 = vmatprep.subr.mxu0 0.0
  %175 = vmatpush1.msra.mxu0 0.0
  %176 = vmatprep.subr.mxu0 0.0
  %177 = vmatpush1.msra.mxu0 0.0
  %178 = vmatprep.subr.mxu0 0.0
  %179 = vmatpush1.msra.mxu0 0.0
  %180 = vmatprep.subr.mxu0 0.0
  %181 = vmatpush1.msra.mxu0 0.0
  %182 = vmatprep.subr.mxu0 0.0
  %183 = vmatpush1.msra.mxu0 0.0
  %184 = vmatprep.subr.mxu0 0.0
  %185 = vmatpush1.msra.mxu0 0.0
  %186 = vmatprep.subr.mxu0 0.0
  %187 = vmatpush1.msra.mxu0 0.0
  %188 = vmatprep.subr.mxu0 0.0
  %189 = vmatpush1.msra.mxu0 0.0
  %190 = vmatprep.subr.mxu0 0.0
  %191 = vmatpush1.msra.mxu0 0.0
  %192 = vmatprep.subr.mxu0 0.0
  %193 = vmatpush1.msra.mxu0 0.0
  %194 = vmatprep.subr.mxu0 0.0
  %195 = vmatpush1.msra.mxu0 0.0
  %196 = vmatprep.subr.mxu0 0.0
  %197 = vmatpush1.msra.mxu0 0.0
  %198 = vmatprep.mubr.f32.mxu0 0.0
  %199 = vmatmul.mubr.f32.gmra.mrb[0].mxu0 %v132
  %v200 = vpop.f32.mrb[0].mxu0
  %v201 = vadd.f32 %v128, %v200
  %v202 = vpop.f32.mrb[0].mxu0
  %203 = vdwg.mxu0
  %v204 = vmax.f32 %v201, 0.0
  %v205 = vld [vmem:[%s5] sm:$0xff]
  %v206 = vld [vmem:[%s5 + $0x8] sm:$0xff]
  %v207 = vld [vmem:[%s5 + $0x10] sm:$0xff]
  %v208 = vld [vmem:[%s5 + $0x18] sm:$0xff]
  %v209 = vld [vmem:[#allocation2] sm:$0x1]
  %v211 = vlaneseq
  %v212 = vshrl.u32 %v211, 7
  %v213 = vsub.s32 0, %v212
  %v214 = vrot.slane %v209, %v213
  %v217 = vsel %vm130, %v204, 0
  %219 = vmatprep.subr.mxu0 0.0
  %220 = vmatpush1.msra.mxu0 %v205
  %221 = vmatprep.subr.mxu0 0.0
  %222 = vmatpush1.msra.mxu0 %v206
  %223 = vmatprep.subr.mxu0 0.0
  %224 = vmatpush1.msra.mxu0 %v207
  %225 = vmatprep.subr.mxu0 0.0
  %226 = vmatpush1.msra.mxu0 %v208
  %227 = vmatprep.subr.mxu0 0.0
  %228 = vmatpush1.msra.mxu0 0.0
  %229 = vmatprep.subr.mxu0 0.0
  %230 = vmatpush1.msra.mxu0 0.0
  %231 = vmatprep.subr.mxu0 0.0
  %232 = vmatpush1.msra.mxu0 0.0
  %233 = vmatprep.subr.mxu0 0.0
  %234 = vmatpush1.msra.mxu0 0.0
  %235 = vmatprep.subr.mxu0 0.0
  %236 = vmatpush1.msra.mxu0 0.0
  %237 = vmatprep.subr.mxu0 0.0
  %238 = vmatpush1.msra.mxu0 0.0
  %239 = vmatprep.subr.mxu0 0.0
  %240 = vmatpush1.msra.mxu0 0.0
  %241 = vmatprep.subr.mxu0 0.0
  %242 = vmatpush1.msra.mxu0 0.0
  %243 = vmatprep.subr.mxu0 0.0
  %244 = vmatpush1.msra.mxu0 0.0
  %245 = vmatprep.subr.mxu0 0.0
  %246 = vmatpush1.msra.mxu0 0.0
  %247 = vmatprep.subr.mxu0 0.0
  %248 = vmatpush1.msra.mxu0 0.0
  %249 = vmatprep.subr.mxu0 0.0
  %250 = vmatpush1.msra.mxu0 0.0
  %251 = vmatprep.subr.mxu0 0.0
  %252 = vmatpush1.msra.mxu0 0.0
  %253 = vmatprep.subr.mxu0 0.0
  %254 = vmatpush1.msra.mxu0 0.0
  %255 = vmatprep.subr.mxu0 0.0
  %256 = vmatpush1.msra.mxu0 0.0
  %257 = vmatprep.subr.mxu0 0.0
  %258 = vmatpush1.msra.mxu0 0.0
  %259 = vmatprep.subr.mxu0 0.0
  %260 = vmatpush1.msra.mxu0 0.0
  %261 = vmatprep.subr.mxu0 0.0
  %262 = vmatpush1.msra.mxu0 0.0
  %263 = vmatprep.subr.mxu0 0.0
  %264 = vmatpush1.msra.mxu0 0.0
  %265 = vmatprep.subr.mxu0 0.0
  %266 = vmatpush1.msra.mxu0 0.0
  %267 = vmatprep.subr.mxu0 0.0
  %268 = vmatpush1.msra.mxu0 0.0
  %269 = vmatprep.subr.mxu0 0.0
  %270 = vmatpush1.msra.mxu0 0.0
  %271 = vmatprep.subr.mxu0 0.0
  %272 = vmatpush1.msra.mxu0 0.0
  %273 = vmatprep.subr.mxu0 0.0
  %274 = vmatpush1.msra.mxu0 0.0
  %275 = vmatprep.subr.mxu0 0.0
  %276 = vmatpush1.msra.mxu0 0.0
  %277 = vmatprep.subr.mxu0 0.0
  %278 = vmatpush1.msra.mxu0 0.0
  %279 = vmatprep.subr.mxu0 0.0
  %280 = vmatpush1.msra.mxu0 0.0
  %281 = vmatprep.subr.mxu0 0.0
  %282 = vmatpush1.msra.mxu0 0.0
  %283 = vmatprep.mubr.f32.mxu0 0.0
  %284 = vmatmul.mubr.f32.gmra.mrb[0].mxu0 %v217
  %v285 = vpop.f32.mrb[0].mxu0
  %v286 = vadd.f32 %v214, %v285
  %v287 = vpop.f32.mrb[0].mxu0
  %288 = vdwg.mxu0
  %vm289 = vcmask 7168
  %290 = vst.msk [vmem:[%s7] sm:$0xff] %vm289, %v286
  // Predicated region
  $region30: #{tpu_custom_call.1} parent=0 // pred_check
    _
  $region31: #{tpu_custom_call.1} parent=0 // pred_check_branch
    %292 = sbr.rel (0) target = $region33
  $region32: #{tpu_custom_call.1} parent=0 // pred_region
    _
  $region33: #{tpu_custom_call.1} parent=0 // pred_fallthru
    _
  // Predicated region
  $region34: #{tpu_custom_call.1} parent=0 // pred_check
    _
  $region35: #{tpu_custom_call.1} parent=0 // pred_check_branch
    %294 = sbr.rel (0) target = $region37
  $region36: #{tpu_custom_call.1} parent=0 // pred_region
    _
  $region37: #{tpu_custom_call.1} parent=0 // pred_fallthru
    _

</llo_original>
